<compile_context>
chip_gen: v6e
topology: v6e:2x2x1
jax: 0.10.0
libtpu: 0.0.40
codegen_flags: <defaults>
</compile_context>

<pallas_src>
import functools

import jax
import jax.numpy as jnp
from jax.experimental import pallas as pl
from jax.experimental.pallas import tpu as pltpu

_MIB = 1024 * 1024


# ----------------------------- kernels ------------------------------

def _mlp_kernel_resident(x_ref, w1_ref, b1_ref, w2_ref, b2_ref, o_ref):
    """Resident-weights path: whole hidden dim per token tile, grid = (M tiles,)."""
    h = jnp.dot(x_ref[...], w1_ref[...], preferred_element_type=jnp.float32)
    h = h + b1_ref[...]
    # QuickGELU: x * sigmoid(1.702 * x), in f32, handed to the MXU as bf16.
    h = (h * jax.nn.sigmoid(1.702 * h)).astype(jnp.bfloat16)
    y = jnp.dot(h, w2_ref[...], preferred_element_type=jnp.float32) + b2_ref[...]
    o_ref[...] = y.astype(o_ref.dtype)


def _mlp_kernel_tiled_f32out(x_ref, w1_ref, b1_ref, w2_ref, b2_ref, o_ref):
    """Hidden-tiled path, f32 output: accumulate the c_proj reduction directly in o_ref."""
    j = pl.program_id(1)

    @pl.when(j == 0)
    def _():
        o_ref[...] = jnp.zeros_like(o_ref)

    h = jnp.dot(x_ref[...], w1_ref[...], preferred_element_type=jnp.float32) + b1_ref[...]
    h = (h * jax.nn.sigmoid(1.702 * h)).astype(jnp.bfloat16)
    o_ref[...] += jnp.dot(h, w2_ref[...], preferred_element_type=jnp.float32)

    @pl.when(j == pl.num_programs(1) - 1)
    def _():
        o_ref[...] = o_ref[...] + b2_ref[...]


def _mlp_kernel_tiled_acc(x_ref, w1_ref, b1_ref, w2_ref, b2_ref, o_ref, acc_ref):
    """Hidden-tiled path with a separate f32 accumulator (non-f32 outputs)."""
    j = pl.program_id(1)

    @pl.when(j == 0)
    def _():
        acc_ref[...] = jnp.zeros_like(acc_ref)

    h = jnp.dot(x_ref[...], w1_ref[...], preferred_element_type=jnp.float32) + b1_ref[...]
    h = (h * jax.nn.sigmoid(1.702 * h)).astype(jnp.bfloat16)
    acc_ref[...] += jnp.dot(h, w2_ref[...], preferred_element_type=jnp.float32)

    @pl.when(j == pl.num_programs(1) - 1)
    def _():
        o_ref[...] = (acc_ref[...] + b2_ref[...]).astype(o_ref.dtype)


# ----------------------------- tile planning ------------------------------

def _round_up(v, m):
    return (v + m - 1) // m * m


def _tpu_hw():
    """(vmem_capacity_bytes, device_kind lowercase) with safe fallbacks."""
    kind = ""
    try:
        kind = jax.devices()[0].device_kind.lower()
    except Exception:
        pass
    vmem = None
    try:
        vmem = int(pltpu.get_tpu_info().vmem_capacity_bytes)
    except Exception:
        vmem = None
    if vmem is None or vmem <= 0:
        if "v5" in kind or "v6" in kind:
            vmem = 128 * _MIB
        else:
            vmem = 64 * _MIB  # conservative (v7x per-TensorCore)
    return vmem, kind


def _est_tiled(tm, th, d_model, out_bytes, use_acc):
    """Double-buffered VMEM bytes for the hidden-tiled plan (+ hidden activation)."""
    e = 2 * (tm * d_model * 2            # x tile (bf16)
             + d_model * th * 2          # W1 tile (bf16)
             + th * d_model * 2          # W2 tile (bf16)
             + th * 4 + d_model * 4      # bias tiles (f32)
             + tm * d_model * out_bytes)  # output tile
    e += tm * th * 6                     # hidden activation (f32 + bf16 copy)
    if use_acc:
        e += tm * d_model * 4
    return e


def _est_resident(tm, d_model, hidden, out_bytes):
    """VMEM bytes for the resident-weights plan (weights counted double-buffered)."""
    e = 2 * (tm * d_model * 2
             + d_model * hidden * 2
             + hidden * d_model * 2
             + hidden * 4 + d_model * 4
             + tm * d_model * out_bytes)
    e += tm * hidden * 6
    return e


def _tile_plan(M, d_model, hidden, out_dtype, tm_hint=None, th_hint=None,
               force_mode=None):
    out_bytes = jnp.dtype(out_dtype).itemsize
    use_acc = jnp.dtype(out_dtype) != jnp.dtype(jnp.float32)

    vmem_cap, kind = _tpu_hw()
    if vmem_cap >= 96 * _MIB:
        budget = 100 * _MIB                                   # v5e / v6e (128 MiB)
    else:
        budget = max(24 * _MIB, min(56 * _MIB, vmem_cap - 8 * _MIB))  # v7x (64 MiB/TC)

    # Per-generation token-tile target so re-streamed weights hide behind MXU work.
    if "v5" in kind:
        tm_target, align = 384, 128
    elif "v6" in kind:
        tm_target, align = 1024, 256
    elif vmem_cap < 96 * _MIB:
        tm_target, align = 768, 256                           # v7x-class
    else:
        tm_target, align = 512, 256
    if tm_hint is not None:
        tm_target, align = int(tm_hint), 8

    def legal_tm(t):
        t = min(int(t), _round_up(M, 8))
        if t >= align:
            t = (t // align) * align
        return max(8, _round_up(t, 8))

    def legal_th(target):
        if hidden % 128 != 0:
            return hidden                                     # odd width: keep whole
        t = max(128, min(int(target), hidden))
        t = (t // 128) * 128
        while hidden % t:
            t -= 128
        return t

    tm0 = legal_tm(tm_target)
    tm_candidates = []
    for v in (tm0, 768, 512, 384, 256, 128):
        t = legal_tm(v)
        if t <= tm0 and t not in tm_candidates:
            tm_candidates.append(t)

    # -- resident-weights fast path --------------------------------------------
    if force_mode != "tiled":
        for t in tm_candidates:
            if t < 256 and t < tm0:
                break          # don't shrink tm below 256 just to keep weights resident
            if _est_resident(t, d_model, hidden, out_bytes) <= budget:
                return "resident", t, hidden, budget
        if force_mode == "resident":
            return "resident", tm_candidates[-1], hidden, budget

    # -- hidden-tiled path (shrink th before tm) --------------------------------
    th_targets = (th_hint,) if th_hint is not None else (512, 256, 128)
    for t in tm_candidates:
        for tht in th_targets:
            th = legal_th(tht)
            if _est_tiled(t, th, d_model, out_bytes, use_acc) <= budget:
                return "tiled", t, th, budget
    return "tiled", legal_tm(128), legal_th(128), budget      # last resort


# ----------------------------- wrapper ------------------------------

def pallas_transformer_mlp(x, c_fc_w, c_fc_b, c_proj_w, c_proj_b, *,
                           tm=None, th=None, force_mode=None, interpret=False):
    """Forward of TransformerMLP (dropouts are identity at inference).

    x:        (..., d_model)
    c_fc_w:   (d_model, 4*d_model)      (PyTorch c_fc.weight.T)
    c_fc_b:   (4*d_model,)
    c_proj_w: (4*d_model, d_model)      (PyTorch c_proj.weight.T)
    c_proj_b: (d_model,)
    """
    orig_shape = x.shape
    out_dtype = x.dtype
    d_model = orig_shape[-1]
    hidden = c_fc_w.shape[1]

    # bf16 activations end-to-end (matches reference numerics; halves x DMA / VMEM).
    x2 = x.reshape(-1, d_model).astype(jnp.bfloat16)
    M = x2.shape[0]

    mode, tm_p, th_p, budget = _tile_plan(M, d_model, hidden, out_dtype,
                                          tm_hint=tm, th_hint=th,
                                          force_mode=force_mode)

    Mp = _round_up(M, tm_p)
    if Mp != M:
        x2 = jnp.pad(x2, ((0, Mp - M), (0, 0)))

    # bf16 weights (half HBM traffic, full-rate MXU); f32 biases.
    w1 = c_fc_w.astype(jnp.bfloat16)
    w2 = c_proj_w.astype(jnp.bfloat16)
    b1 = c_fc_b.reshape(1, hidden).astype(jnp.float32)
    b2 = c_proj_b.reshape(1, d_model).astype(jnp.float32)

    out_bytes = jnp.dtype(out_dtype).itemsize

    if mode == "resident":
        est = _est_resident(tm_p, d_model, hidden, out_bytes)
        vmem_limit = int(min(budget, max(est * 5 // 4, 8 * _MIB)))
        out = pl.pallas_call(
            _mlp_kernel_resident,
            out_shape=jax.ShapeDtypeStruct((Mp, d_model), out_dtype),
            grid_spec=pltpu.PrefetchScalarGridSpec(
                num_scalar_prefetch=0,
                grid=(Mp // tm_p,),
                in_specs=[
                    pl.BlockSpec((tm_p, d_model), lambda i: (i, 0)),    # x
                    pl.BlockSpec((d_model, hidden), lambda i: (0, 0)),  # W1 (resident)
                    pl.BlockSpec((1, hidden), lambda i: (0, 0)),        # b1
                    pl.BlockSpec((hidden, d_model), lambda i: (0, 0)),  # W2 (resident)
                    pl.BlockSpec((1, d_model), lambda i: (0, 0)),       # b2
                ],
                out_specs=pl.BlockSpec((tm_p, d_model), lambda i: (i, 0)),
            ),
            compiler_params=pltpu.CompilerParams(
                dimension_semantics=("parallel",),
                vmem_limit_bytes=vmem_limit,
            ),
            interpret=interpret,
        )(x2, w1, b1, w2, b2)
    else:
        use_acc = jnp.dtype(out_dtype) != jnp.dtype(jnp.float32)
        kernel = _mlp_kernel_tiled_acc if use_acc else _mlp_kernel_tiled_f32out
        scratch = [pltpu.VMEM((tm_p, d_model), jnp.float32)] if use_acc else []
        est = _est_tiled(tm_p, th_p, d_model, out_bytes, use_acc)
        vmem_limit = int(min(budget, max(est * 5 // 4, 8 * _MIB)))
        out = pl.pallas_call(
            kernel,
            out_shape=jax.ShapeDtypeStruct((Mp, d_model), out_dtype),
            grid_spec=pltpu.PrefetchScalarGridSpec(
                num_scalar_prefetch=0,
                grid=(Mp // tm_p, hidden // th_p),
                in_specs=[
                    pl.BlockSpec((tm_p, d_model), lambda i, j: (i, 0)),  # x
                    pl.BlockSpec((d_model, th_p), lambda i, j: (0, j)),  # W1 tile
                    pl.BlockSpec((1, th_p), lambda i, j: (0, j)),        # b1 tile
                    pl.BlockSpec((th_p, d_model), lambda i, j: (j, 0)),  # W2 tile
                    pl.BlockSpec((1, d_model), lambda i, j: (0, 0)),     # b2
                ],
                out_specs=pl.BlockSpec((tm_p, d_model), lambda i, j: (i, 0)),
                scratch_shapes=scratch,
            ),
            compiler_params=pltpu.CompilerParams(
                dimension_semantics=("parallel", "arbitrary"),
                vmem_limit_bytes=vmem_limit,
            ),
            interpret=interpret,
        )(x2, w1, b1, w2, b2)

    return out[:M].reshape(orig_shape).astype(out_dtype)


# ----------------------------- pure-JAX reference ------------------------------

def transformer_mlp_reference(x, c_fc_w, c_fc_b, c_proj_w, c_proj_b):
    """Reference with the same bf16-input / f32-accumulation numerics (intentional)."""
    shape = x.shape
    x2 = x.reshape(-1, shape[-1]).astype(jnp.bfloat16)
    h = jnp.dot(x2, c_fc_w.astype(jnp.bfloat16),
                preferred_element_type=jnp.float32) + c_fc_b.astype(jnp.float32)
    h = (h * jax.nn.sigmoid(1.702 * h)).astype(jnp.bfloat16)
    y = jnp.dot(h, c_proj_w.astype(jnp.bfloat16),
                preferred_element_type=jnp.float32) + c_proj_b.astype(jnp.float32)
    return y.astype(x.dtype).reshape(shape)


# ----------------------------- demo ------------------------------

if __name__ == "__main__":
    # TODO(synk): nn.Dropout (drop1/drop2) is identity at inference and is not modeled.
    key = jax.random.PRNGKey(0)
    k1, k2, k3, k4, kx = jax.random.split(key, 5)

    B, L, D = 2, 128, 64          # batch, sequence, d_model
    H = 4 * D                     # MLP hidden width

    x = jax.random.normal(kx, (B, L, D), jnp.float32)
    c_fc_w = jax.random.normal(k1, (D, H), jnp.float32) * (D ** -0.5)
    c_fc_b = jax.random.normal(k2, (H,), jnp.float32) * 0.02
    c_proj_w = jax.random.normal(k3, (H, D), jnp.float32) * (H ** -0.5)
    c_proj_b = jax.random.normal(k4, (D,), jnp.float32) * 0.02

    ref = transformer_mlp_reference(x, c_fc_w, c_fc_b, c_proj_w, c_proj_b)

    def check(out, reference, name):
        assert out.shape == reference.shape, name
        assert bool(jnp.all(jnp.isfinite(out))), name
        err = float(jnp.max(jnp.abs(out.astype(jnp.float32)
                                    - reference.astype(jnp.float32))))
        assert err < 5e-2, f"{name}: max abs error vs reference: {err}"

    # 1) auto plan: resident-weights fast path (weights fit VMEM at this size).
    out_auto = jax.block_until_ready(
        jax.jit(pallas_transformer_mlp)(x, c_fc_w, c_fc_b, c_proj_w, c_proj_b))
    check(out_auto, ref, "auto/resident")

    # 2) forced hidden-tiled path: f32 output accumulates directly in o_ref (no scratch).
    fwd_tiled = jax.jit(functools.partial(pallas_transformer_mlp,
                                          force_mode="tiled", tm=128, th=128))
    out_tiled = jax.block_until_ready(fwd_tiled(x, c_fc_w, c_fc_b, c_proj_w, c_proj_b))
    check(out_tiled, ref, "tiled-f32")

    # 3) forced tiled path with bf16 input/output (separate f32 accumulator variant).
    xb = x.astype(jnp.bfloat16)
    ref_b = transformer_mlp_reference(xb, c_fc_w, c_fc_b, c_proj_w, c_proj_b)
    out_b = jax.block_until_ready(fwd_tiled(xb, c_fc_w, c_fc_b, c_proj_w, c_proj_b))
    check(out_b, ref_b, "tiled-bf16")

    print("KERNEL_OK")
</pallas_src>

<mosaic_0001>
module attributes {stable_mosaic.version = 11 : i64} {
  func.func @_mlp_kernel_resident(%arg0: i32, %arg1: memref<256x64xbf16, #tpu.memory_space<vmem>>, %arg2: memref<64x256xbf16, #tpu.memory_space<vmem>>, %arg3: memref<1x256xf32, #tpu.memory_space<vmem>>, %arg4: memref<256x64xbf16, #tpu.memory_space<vmem>>, %arg5: memref<1x64xf32, #tpu.memory_space<vmem>>, %arg6: memref<256x64xf32, #tpu.memory_space<vmem>>) attributes {dimension_semantics = [#tpu.dimension_semantics<parallel>], iteration_bounds = array<i64: 1>, scalar_prefetch = 0 : i64, scratch_operands = 0 : i64, tpu.core_type = #tpu.core_type<tc>, window_params = [{transform_indices = @transform_0, window_bounds = array<i64: 256, 64>}, {pipeline_mode = #tpu.pipeline_mode<synchronous>, transform_indices = @transform_1, window_bounds = array<i64: 64, 256>}, {pipeline_mode = #tpu.pipeline_mode<synchronous>, transform_indices = @transform_2, window_bounds = array<i64: 1, 256>}, {pipeline_mode = #tpu.pipeline_mode<synchronous>, transform_indices = @transform_3, window_bounds = array<i64: 256, 64>}, {pipeline_mode = #tpu.pipeline_mode<synchronous>, transform_indices = @transform_4, window_bounds = array<i64: 1, 64>}, {transform_indices = @transform_5, window_bounds = array<i64: 256, 64>}]} {
    %c0 = arith.constant 0 : index
    %c0_0 = arith.constant 0 : index
    %0 = vector.load %arg1[%c0, %c0_0] : memref<256x64xbf16, #tpu.memory_space<vmem>>, vector<256x64xbf16>
    %c0_1 = arith.constant 0 : index
    %c0_2 = arith.constant 0 : index
    %1 = vector.load %arg2[%c0_1, %c0_2] : memref<64x256xbf16, #tpu.memory_space<vmem>>, vector<64x256xbf16>
    %cst = arith.constant dense<0.000000e+00> : vector<256x256xf32>
    %2 = tpu.matmul %0, %1, %cst {dimension_numbers = #tpu.dot_dimension_numbers<[1], [0], [0], [1], [0, 0, 1, 1], [], []>} : vector<256x64xbf16>, vector<64x256xbf16>, vector<256x256xf32> -> vector<256x256xf32>
    %c0_3 = arith.constant 0 : index
    %c0_4 = arith.constant 0 : index
    %3 = vector.load %arg3[%c0_3, %c0_4] : memref<1x256xf32, #tpu.memory_space<vmem>>, vector<1x256xf32>
    %4 = vector.broadcast %3 : vector<1x256xf32> to vector<256x256xf32>
    %5 = arith.addf %2, %4 : vector<256x256xf32>
    %cst_5 = arith.constant 1.702000e+00 : f32
    %6 = vector.broadcast %cst_5 : f32 to vector<256x256xf32>
    %7 = arith.mulf %6, %5 : vector<256x256xf32>
    %8 = arith.negf %7 : vector<256x256xf32>
    %9 = math.exp %8 : vector<256x256xf32>
    %cst_6 = arith.constant 1.000000e+00 : f32
    %10 = vector.broadcast %cst_6 : f32 to vector<256x256xf32>
    %11 = arith.addf %10, %9 : vector<256x256xf32>
    %12 = arith.divf %10, %11 : vector<256x256xf32>
    %13 = arith.mulf %5, %12 : vector<256x256xf32>
    %14 = arith.truncf %13 : vector<256x256xf32> to vector<256x256xbf16>
    %c0_7 = arith.constant 0 : index
    %c0_8 = arith.constant 0 : index
    %15 = vector.load %arg4[%c0_7, %c0_8] : memref<256x64xbf16, #tpu.memory_space<vmem>>, vector<256x64xbf16>
    %cst_9 = arith.constant dense<0.000000e+00> : vector<256x64xf32>
    %16 = tpu.matmul %14, %15, %cst_9 {dimension_numbers = #tpu.dot_dimension_numbers<[1], [0], [0], [1], [0, 0, 1, 1], [], []>} : vector<256x256xbf16>, vector<256x64xbf16>, vector<256x64xf32> -> vector<256x64xf32>
    %c0_10 = arith.constant 0 : index
    %c0_11 = arith.constant 0 : index
    %17 = vector.load %arg5[%c0_10, %c0_11] : memref<1x64xf32, #tpu.memory_space<vmem>>, vector<1x64xf32>
    %18 = vector.broadcast %17 : vector<1x64xf32> to vector<256x64xf32>
    %19 = arith.addf %16, %18 : vector<256x64xf32>
    %c0_12 = arith.constant 0 : index
    %c0_13 = arith.constant 0 : index
    %20 = vector.load %arg6[%c0_12, %c0_13] : memref<256x64xf32, #tpu.memory_space<vmem>>, vector<256x64xf32>
    tpu.vector_store %arg6[%c0_12, %c0_13], %19 {strides = array<i32>} : memref<256x64xf32, #tpu.memory_space<vmem>>, vector<256x64xf32>,
    return
  }
  func.func @transform_0(%arg0: i32) -> (i32, i32) {
    %c0_i32 = arith.constant 0 : i32
    %c0_i32_0 = arith.constant 0 : i32
    return %arg0, %c0_i32 : i32, i32
  }
  func.func @transform_1(%arg0: i32) -> (i32, i32) {
    %c0_i32 = arith.constant 0 : i32
    %c0_i32_0 = arith.constant 0 : i32
    %c0_i32_1 = arith.constant 0 : i32
    return %c0_i32, %c0_i32_0 : i32, i32
  }
  func.func @transform_2(%arg0: i32) -> (i32, i32) {
    %c0_i32 = arith.constant 0 : i32
    %c0_i32_0 = arith.constant 0 : i32
    %c0_i32_1 = arith.constant 0 : i32
    return %c0_i32, %c0_i32_0 : i32, i32
  }
  func.func @transform_3(%arg0: i32) -> (i32, i32) {
    %c0_i32 = arith.constant 0 : i32
    %c0_i32_0 = arith.constant 0 : i32
    %c0_i32_1 = arith.constant 0 : i32
    return %c0_i32, %c0_i32_0 : i32, i32
  }
  func.func @transform_4(%arg0: i32) -> (i32, i32) {
    %c0_i32 = arith.constant 0 : i32
    %c0_i32_0 = arith.constant 0 : i32
    %c0_i32_1 = arith.constant 0 : i32
    return %c0_i32, %c0_i32_0 : i32, i32
  }
  func.func @transform_5(%arg0: i32) -> (i32, i32) {
    %c0_i32 = arith.constant 0 : i32
    %c0_i32_0 = arith.constant 0 : i32
    return %arg0, %c0_i32 : i32, i32
  }
}

</mosaic_0001>

<llo_original>
// kernel: pallas_transformer_mlp.1
$region0: #{pallas_transformer_mlp.1}
  #allocation0 [shape = 'u32[]', space=smem, size = 0x4, offset = 0x4, fixed_abs, tag = 'smem constant byte address 0x4 - core index']
  #allocation1 [shape = 'u32[144,128]{1,0:T(1,128)}', space=vmem, size = 0x12000, scoped, tag = 'internal scratch']
  %s0 = inlined_call_operand.vmem [shape: bf16[256,64], index: 0, kind: input, shape index: {}]
  %s1 = inlined_call_operand.vmem [shape: bf16[64,256], index: 1, kind: input, shape index: {}]
  %s2 = inlined_call_operand.vmem [shape: f32[1,256], index: 2, kind: input, shape index: {}]
  %s3 = inlined_call_operand.vmem [shape: bf16[256,64], index: 3, kind: input, shape index: {}]
  %s4 = inlined_call_operand.vmem [shape: f32[1,64], index: 4, kind: input, shape index: {}]
  %s5 = inlined_call_operand.vmem [shape: f32[256,64], index: 5, kind: output, shape index: {}]
  %s6 = sld [smem:[#allocation0]]
  $region30: #{pallas_transformer_mlp.1} parent=0
    _
  %s8 = ssub.s32 1, %s6
  %s9 = scalar_select 0, %s8, %s6
  // Predicated region
  $region2: #{pallas_transformer_mlp.1} parent=0 // pred_check
    _
  $region3: #{pallas_transformer_mlp.1} parent=0 // pred_check_branch
    %11 = sbr.rel (0) target = $region5
  $region4: #{pallas_transformer_mlp.1} parent=0 // pred_region
    _
  $region5: #{pallas_transformer_mlp.1} parent=0 // pred_fallthru
    _
  // Predicated region
  $region6: #{pallas_transformer_mlp.1} parent=0 // pred_check
    _
  $region7: #{pallas_transformer_mlp.1} parent=0 // pred_check_branch
    %13 = sbr.rel (0) target = $region9
  $region8: #{pallas_transformer_mlp.1} parent=0 // pred_region
    _
  $region9: #{pallas_transformer_mlp.1} parent=0 // pred_fallthru
    _
  // Predicated region
  $region10: #{pallas_transformer_mlp.1} parent=0 // pred_check
    _
  $region11: #{pallas_transformer_mlp.1} parent=0 // pred_check_branch
    %15 = sbr.rel (0) target = $region13
  $region12: #{pallas_transformer_mlp.1} parent=0 // pred_region
    _
  $region13: #{pallas_transformer_mlp.1} parent=0 // pred_fallthru
    _
  // Predicated region
  $region14: #{pallas_transformer_mlp.1} parent=0 // pred_check
    _
  $region15: #{pallas_transformer_mlp.1} parent=0 // pred_check_branch
    %17 = sbr.rel (0) target = $region17
  $region16: #{pallas_transformer_mlp.1} parent=0 // pred_region
    _
  $region17: #{pallas_transformer_mlp.1} parent=0 // pred_fallthru
    _
  // Predicated region
  $region18: #{pallas_transformer_mlp.1} parent=0 // pred_check
    _
  $region19: #{pallas_transformer_mlp.1} parent=0 // pred_check_branch
    %19 = sbr.rel (0) target = $region21
  $region20: #{pallas_transformer_mlp.1} parent=0 // pred_region
    _
  $region21: #{pallas_transformer_mlp.1} parent=0 // pred_fallthru
    _
  %v21 = vld [vmem:[%s0] sm:$0xf]
  %v22 = vld [vmem:[%s0 + $0x4] sm:$0xf]
  %v23 = vld [vmem:[%s0 + $0x8] sm:$0xf]
  %v24 = vld [vmem:[%s0 + $0xc] sm:$0xf]
  %v25 = vld [vmem:[%s0 + $0x10] sm:$0xf]
  %v26 = vld [vmem:[%s0 + $0x14] sm:$0xf]
  %v27 = vld [vmem:[%s0 + $0x18] sm:$0xf]
  %v28 = vld [vmem:[%s0 + $0x1c] sm:$0xf]
  %v29 = vld [vmem:[%s0 + $0x20] sm:$0xf]
  %v30 = vld [vmem:[%s0 + $0x24] sm:$0xf]
  %v31 = vld [vmem:[%s0 + $0x28] sm:$0xf]
  %v32 = vld [vmem:[%s0 + $0x2c] sm:$0xf]
  %v33 = vld [vmem:[%s0 + $0x30] sm:$0xf]
  %v34 = vld [vmem:[%s0 + $0x34] sm:$0xf]
  %v35 = vld [vmem:[%s0 + $0x38] sm:$0xf]
  %v36 = vld [vmem:[%s0 + $0x3c] sm:$0xf]
  %v37 = vld [vmem:[%s0 + $0x40] sm:$0xf]
  %v38 = vld [vmem:[%s0 + $0x44] sm:$0xf]
  %v39 = vld [vmem:[%s0 + $0x48] sm:$0xf]
  %v40 = vld [vmem:[%s0 + $0x4c] sm:$0xf]
  %v41 = vld [vmem:[%s0 + $0x50] sm:$0xf]
  %v42 = vld [vmem:[%s0 + $0x54] sm:$0xf]
  %v43 = vld [vmem:[%s0 + $0x58] sm:$0xf]
  %v44 = vld [vmem:[%s0 + $0x5c] sm:$0xf]
  %v45 = vld [vmem:[%s0 + $0x60] sm:$0xf]
  %v46 = vld [vmem:[%s0 + $0x64] sm:$0xf]
  %v47 = vld [vmem:[%s0 + $0x68] sm:$0xf]
  %v48 = vld [vmem:[%s0 + $0x6c] sm:$0xf]
  %v49 = vld [vmem:[%s0 + $0x70] sm:$0xf]
  %v50 = vld [vmem:[%s0 + $0x74] sm:$0xf]
  %v51 = vld [vmem:[%s0 + $0x78] sm:$0xf]
  %v52 = vld [vmem:[%s0 + $0x7c] sm:$0xf]
  %v53 = vld [vmem:[%s1] sm:$0xff]
  %v54 = vld [vmem:[%s1 + $0x8] sm:$0xff]
  %v55 = vld [vmem:[%s1 + $0x10] sm:$0xff]
  %v56 = vld [vmem:[%s1 + $0x18] sm:$0xff]
  %v57 = vld [vmem:[%s1 + $0x20] sm:$0xff]
  %v58 = vld [vmem:[%s1 + $0x28] sm:$0xff]
  %v59 = vld [vmem:[%s1 + $0x30] sm:$0xff]
  %v60 = vld [vmem:[%s1 + $0x38] sm:$0xff]
  %v61 = vld [vmem:[%s2] sm:$0x3]
  %v63 = vlaneseq
  %v64 = vshrl.u32 %v63, 7
  %v65 = vsub.s32 0, %v64
  %v66 = vrot.slane %v61, %v65
  %v67 = vlaneseq
  %v68 = vshrl.u32 %v67, 7
  %v69 = vsub.s32 1, %v68
  %v70 = vrot.slane %v61, %v69
  %v105 = vunpack.c.l.b16 %v21
  %v106 = vunpack.c.l.b16 %v22
  %v107 = vunpack.c.l.b16 %v23
  %v108 = vunpack.c.l.b16 %v24
  %v109 = vunpack.c.l.b16 %v25
  %v110 = vunpack.c.l.b16 %v26
  %v111 = vunpack.c.l.b16 %v27
  %v112 = vunpack.c.l.b16 %v28
  %v113 = vunpack.c.l.b16 %v29
  %v114 = vunpack.c.l.b16 %v30
  %v115 = vunpack.c.l.b16 %v31
  %v116 = vunpack.c.l.b16 %v32
  %v117 = vunpack.c.l.b16 %v33
  %v118 = vunpack.c.l.b16 %v34
  %v119 = vunpack.c.l.b16 %v35
  %v120 = vunpack.c.l.b16 %v36
  %v121 = vunpack.c.l.b16 %v37
  %v122 = vunpack.c.l.b16 %v38
  %v123 = vunpack.c.l.b16 %v39
  %v124 = vunpack.c.l.b16 %v40
  %v125 = vunpack.c.l.b16 %v41
  %v126 = vunpack.c.l.b16 %v42
  %v127 = vunpack.c.l.b16 %v43
  %v128 = vunpack.c.l.b16 %v44
  %v129 = vunpack.c.l.b16 %v45
  %v130 = vunpack.c.l.b16 %v46
  %v131 = vunpack.c.l.b16 %v47
  %v132 = vunpack.c.l.b16 %v48
  %v133 = vunpack.c.l.b16 %v49
  %v134 = vunpack.c.l.b16 %v50
  %v135 = vunpack.c.l.b16 %v51
  %v136 = vunpack.c.l.b16 %v52
  %v137 = vpack.c.b16 %v106, %v105
  %v138 = vpack.c.b16 %v108, %v107
  %v139 = vpack.c.b16 %v110, %v109
  %v140 = vpack.c.b16 %v112, %v111
  %v141 = vpack.c.b16 %v114, %v113
  %v142 = vpack.c.b16 %v116, %v115
  %v143 = vpack.c.b16 %v118, %v117
  %v144 = vpack.c.b16 %v120, %v119
  %v145 = vpack.c.b16 %v122, %v121
  %v146 = vpack.c.b16 %v124, %v123
  %v147 = vpack.c.b16 %v126, %v125
  %v148 = vpack.c.b16 %v128, %v127
  %v149 = vpack.c.b16 %v130, %v129
  %v150 = vpack.c.b16 %v132, %v131
  %v151 = vpack.c.b16 %v134, %v133
  %v152 = vpack.c.b16 %v136, %v135
  %v161 = vunpack.c.l.b16 %v53
  %v162 = vunpack.c.h.b16 %v53
  %v163 = vunpack.c.l.b16 %v54
  %v164 = vunpack.c.h.b16 %v54
  %v165 = vunpack.c.l.b16 %v55
  %v166 = vunpack.c.h.b16 %v55
  %v167 = vunpack.c.l.b16 %v56
  %v168 = vunpack.c.h.b16 %v56
  %v169 = vunpack.c.l.b16 %v57
  %v170 = vunpack.c.h.b16 %v57
  %v171 = vunpack.c.l.b16 %v58
  %v172 = vunpack.c.h.b16 %v58
  %v173 = vunpack.c.l.b16 %v59
  %v174 = vunpack.c.h.b16 %v59
  %v175 = vunpack.c.l.b16 %v60
  %v176 = vunpack.c.h.b16 %v60
  %v177 = vpack.c.b16 %v163, %v161
  %v178 = vpack.c.b16 %v164, %v162
  %v179 = vpack.c.b16 %v167, %v165
  %v180 = vpack.c.b16 %v168, %v166
  %v181 = vpack.c.b16 %v171, %v169
  %v182 = vpack.c.b16 %v172, %v170
  %v183 = vpack.c.b16 %v175, %v173
  %v184 = vpack.c.b16 %v176, %v174
  %vm193 = vcmask 523264
  %v195 = vsel %vm193, %v137, 0
  %v198 = vsel %vm193, %v138, 0
  %v201 = vsel %vm193, %v139, 0
  %v204 = vsel %vm193, %v140, 0
  %v207 = vsel %vm193, %v141, 0
  %v210 = vsel %vm193, %v142, 0
  %v213 = vsel %vm193, %v143, 0
  %v216 = vsel %vm193, %v144, 0
  %v219 = vsel %vm193, %v145, 0
  %v222 = vsel %vm193, %v146, 0
  %v225 = vsel %vm193, %v147, 0
  %v228 = vsel %vm193, %v148, 0
  %v231 = vsel %vm193, %v149, 0
  %v234 = vsel %vm193, %v150, 0
  %v237 = vsel %vm193, %v151, 0
  %v240 = vsel %vm193, %v152, 0
  %242 = vmatprep.subr.bf16.mxu0 0
  %243 = vmatpush1.bf16.msra.mxu0 0
  %244 = vmatprep.subr.bf16.mxu0 0
  %245 = vmatpush1.bf16.msra.mxu0 0
  %246 = vmatprep.subr.bf16.mxu0 0
  %247 = vmatpush1.bf16.msra.mxu0 0
  %248 = vmatprep.subr.bf16.mxu0 0
  %249 = vmatpush1.bf16.msra.mxu0 0
  %250 = vmatprep.subr.bf16.mxu0 %v184
  %251 = vmatpush1.bf16.msra.mxu0 %v183
  %252 = vmatprep.subr.bf16.mxu0 %v182
  %253 = vmatpush1.bf16.msra.mxu0 %v181
  %254 = vmatprep.subr.bf16.mxu0 %v180
  %255 = vmatpush1.bf16.msra.mxu0 %v179
  %256 = vmatprep.subr.bf16.mxu0 %v178
  %257 = vmatpush1.bf16.msra.mxu0 %v177
  %258 = vmatprep.subr.bf16.mxu0 0
  %259 = vmatpush2.bf16.msra.mxu0 0
  %260 = vmatprep.subr.bf16.mxu0 0
  %261 = vmatpush2.bf16.msra.mxu0 0
  %262 = vmatprep.subr.bf16.mxu0 0
  %263 = vmatpush2.bf16.msra.mxu0 0
  %264 = vmatprep.subr.bf16.mxu0 0
  %265 = vmatpush2.bf16.msra.mxu0 0
  %266 = vmatprep.subr.bf16.mxu0 0
  %267 = vmatpush2.bf16.msra.mxu0 0
  %268 = vmatprep.subr.bf16.mxu0 0
  %269 = vmatpush2.bf16.msra.mxu0 0
  %270 = vmatprep.subr.bf16.mxu0 0
  %271 = vmatpush2.bf16.msra.mxu0 0
  %272 = vmatprep.subr.bf16.mxu0 0
  %273 = vmatpush2.bf16.msra.mxu0 0
  %274 = vmatprep.mubr.bf16.mxu0 0
  %275 = vmatmul.mubr.bf16.gmra.mxu0 %v195
  %v276 = vpop.f32.mrf.mxu0
  %v277 = vadd.f32 %v66, %v276
  %v278 = vpop.f32.mrf.mxu0
  %v279 = vadd.f32 %v70, %v278
  %v280 = vpop.f32.mrf.mxu0
  %v281 = vadd.f32 %v66, %v280
  %v282 = vpop.f32.mrf.mxu0
  %v283 = vadd.f32 %v70, %v282
  %284 = vmatprep.mubr.bf16.mxu0 0
  %285 = vmatmul.mubr.bf16.gmra.mxu0 %v198
  %v286 = vpop.f32.mrf.mxu0
  %v287 = vadd.f32 %v66, %v286
  %v288 = vpop.f32.mrf.mxu0
  %v289 = vadd.f32 %v70, %v288
  %v290 = vpop.f32.mrf.mxu0
  %v291 = vadd.f32 %v66, %v290
  %v292 = vpop.f32.mrf.mxu0
  %v293 = vadd.f32 %v70, %v292
  %294 = vmatprep.mubr.bf16.mxu0 0
  %295 = vmatmul.mubr.bf16.gmra.mxu0 %v201
  %v296 = vpop.f32.mrf.mxu0
  %v297 = vadd.f32 %v66, %v296
  %v298 = vpop.f32.mrf.mxu0
  %v299 = vadd.f32 %v70, %v298
  %v300 = vpop.f32.mrf.mxu0
  %v301 = vadd.f32 %v66, %v300
  %v302 = vpop.f32.mrf.mxu0
  %v303 = vadd.f32 %v70, %v302
  %304 = vmatprep.mubr.bf16.mxu0 0
  %305 = vmatmul.mubr.bf16.gmra.mxu0 %v204
  %v306 = vpop.f32.mrf.mxu0
  %v307 = vadd.f32 %v66, %v306
  %v308 = vpop.f32.mrf.mxu0
  %v309 = vadd.f32 %v70, %v308
  %v310 = vpop.f32.mrf.mxu0
  %v311 = vadd.f32 %v66, %v310
  %v312 = vpop.f32.mrf.mxu0
  %v313 = vadd.f32 %v70, %v312
  %314 = vmatprep.mubr.bf16.mxu0 0
  %315 = vmatmul.mubr.bf16.gmra.mxu0 %v207
  %v316 = vpop.f32.mrf.mxu0
  %v317 = vadd.f32 %v66, %v316
  %v318 = vpop.f32.mrf.mxu0
  %v319 = vadd.f32 %v70, %v318
  %v320 = vpop.f32.mrf.mxu0
  %v321 = vadd.f32 %v66, %v320
  %v322 = vpop.f32.mrf.mxu0
  %v323 = vadd.f32 %v70, %v322
  %324 = vmatprep.mubr.bf16.mxu0 0
  %325 = vmatmul.mubr.bf16.gmra.mxu0 %v210
  %v326 = vpop.f32.mrf.mxu0
  %v327 = vadd.f32 %v66, %v326
  %v328 = vpop.f32.mrf.mxu0
  %v329 = vadd.f32 %v70, %v328
  %v330 = vpop.f32.mrf.mxu0
  %v331 = vadd.f32 %v66, %v330
  %v332 = vpop.f32.mrf.mxu0
  %v333 = vadd.f32 %v70, %v332
  %334 = vmatprep.mubr.bf16.mxu0 0
  %335 = vmatmul.mubr.bf16.gmra.mxu0 %v213
  %v336 = vpop.f32.mrf.mxu0
  %v337 = vadd.f32 %v66, %v336
  %v338 = vpop.f32.mrf.mxu0
  %v339 = vadd.f32 %v70, %v338
  %v340 = vpop.f32.mrf.mxu0
  %v341 = vadd.f32 %v66, %v340
  %v342 = vpop.f32.mrf.mxu0
  %v343 = vadd.f32 %v70, %v342
  %344 = vmatprep.mubr.bf16.mxu0 0
  %345 = vmatmul.mubr.bf16.gmra.mxu0 %v216
  %v346 = vpop.f32.mrf.mxu0
  %v347 = vadd.f32 %v66, %v346
  %v348 = vpop.f32.mrf.mxu0
  %v349 = vadd.f32 %v70, %v348
  %v350 = vpop.f32.mrf.mxu0
  %v351 = vadd.f32 %v66, %v350
  %v352 = vpop.f32.mrf.mxu0
  %v353 = vadd.f32 %v70, %v352
  %354 = vmatprep.mubr.bf16.mxu0 0
  %355 = vmatmul.mubr.bf16.gmra.mxu0 %v219
  %v356 = vpop.f32.mrf.mxu0
  %v357 = vadd.f32 %v66, %v356
  %v358 = vpop.f32.mrf.mxu0
  %v359 = vadd.f32 %v70, %v358
  %v360 = vpop.f32.mrf.mxu0
  %v361 = vadd.f32 %v66, %v360
  %v362 = vpop.f32.mrf.mxu0
  %v363 = vadd.f32 %v70, %v362
  %364 = vmatprep.mubr.bf16.mxu0 0
  %365 = vmatmul.mubr.bf16.gmra.mxu0 %v222
  %v366 = vpop.f32.mrf.mxu0
  %v367 = vadd.f32 %v66, %v366
  %v368 = vpop.f32.mrf.mxu0
  %v369 = vadd.f32 %v70, %v368
  %v370 = vpop.f32.mrf.mxu0
  %v371 = vadd.f32 %v66, %v370
  %v372 = vpop.f32.mrf.mxu0
  %v373 = vadd.f32 %v70, %v372
  %374 = vmatprep.mubr.bf16.mxu0 0
  %375 = vmatmul.mubr.bf16.gmra.mxu0 %v225
  %v376 = vpop.f32.mrf.mxu0
  %v377 = vadd.f32 %v66, %v376
  %v378 = vpop.f32.mrf.mxu0
  %v379 = vadd.f32 %v70, %v378
  %v380 = vpop.f32.mrf.mxu0
  %v381 = vadd.f32 %v66, %v380
  %v382 = vpop.f32.mrf.mxu0
  %v383 = vadd.f32 %v70, %v382
  %384 = vmatprep.mubr.bf16.mxu0 0
  %385 = vmatmul.mubr.bf16.gmra.mxu0 %v228
  %v386 = vpop.f32.mrf.mxu0
  %v387 = vadd.f32 %v66, %v386
  %v388 = vpop.f32.mrf.mxu0
  %v389 = vadd.f32 %v70, %v388
  %v390 = vpop.f32.mrf.mxu0
  %v391 = vadd.f32 %v66, %v390
  %v392 = vpop.f32.mrf.mxu0
  %v393 = vadd.f32 %v70, %v392
  %394 = vmatprep.mubr.bf16.mxu0 0
  %395 = vmatmul.mubr.bf16.gmra.mxu0 %v231
  %v396 = vpop.f32.mrf.mxu0
  %v397 = vadd.f32 %v66, %v396
  %v398 = vpop.f32.mrf.mxu0
  %v399 = vadd.f32 %v70, %v398
  %v400 = vpop.f32.mrf.mxu0
  %v401 = vadd.f32 %v66, %v400
  %v402 = vpop.f32.mrf.mxu0
  %v403 = vadd.f32 %v70, %v402
  %404 = vmatprep.mubr.bf16.mxu0 0
  %405 = vmatmul.mubr.bf16.gmra.mxu0 %v234
  %v406 = vpop.f32.mrf.mxu0
  %v407 = vadd.f32 %v66, %v406
  %v408 = vpop.f32.mrf.mxu0
  %v409 = vadd.f32 %v70, %v408
  %v410 = vpop.f32.mrf.mxu0
  %v411 = vadd.f32 %v66, %v410
  %v412 = vpop.f32.mrf.mxu0
  %v413 = vadd.f32 %v70, %v412
  %414 = vmatprep.mubr.bf16.mxu0 0
  %415 = vmatmul.mubr.bf16.gmra.mxu0 %v237
  %v416 = vpop.f32.mrf.mxu0
  %v417 = vadd.f32 %v66, %v416
  %v418 = vpop.f32.mrf.mxu0
  %v419 = vadd.f32 %v70, %v418
  %v420 = vpop.f32.mrf.mxu0
  %v421 = vadd.f32 %v66, %v420
  %v422 = vpop.f32.mrf.mxu0
  %v423 = vadd.f32 %v70, %v422
  %424 = vmatprep.mubr.bf16.mxu0 0
  %425 = vmatmul.mubr.bf16.gmra.mxu0 %v240
  %v426 = vpop.f32.mrf.mxu0
  %v427 = vadd.f32 %v66, %v426
  %v428 = vpop.f32.mrf.mxu0
  %v429 = vadd.f32 %v70, %v428
  %v430 = vpop.f32.mrf.mxu0
  %v431 = vadd.f32 %v66, %v430
  %v432 = vpop.f32.mrf.mxu0
  %v433 = vadd.f32 %v70, %v432
  %434 = vdwg.mxu0
  %v435 = vmul.f32 %v277, 1.702
  %v436 = vmul.f32 %v279, 1.702
  %v437 = vmul.f32 %v281, 1.702
  %v438 = vmul.f32 %v283, 1.702
  %v439 = vmul.f32 %v287, 1.702
  %v440 = vmul.f32 %v289, 1.702
  %v441 = vmul.f32 %v291, 1.702
  %v442 = vmul.f32 %v293, 1.702
  %v443 = vmul.f32 %v297, 1.702
  %v444 = vmul.f32 %v299, 1.702
  %v445 = vmul.f32 %v301, 1.702
  %v446 = vmul.f32 %v303, 1.702
  %v447 = vmul.f32 %v307, 1.702
  %v448 = vmul.f32 %v309, 1.702
  %v449 = vmul.f32 %v311, 1.702
  %v450 = vmul.f32 %v313, 1.702
  %v451 = vmul.f32 %v317, 1.702
  %v452 = vmul.f32 %v319, 1.702
  %v453 = vmul.f32 %v321, 1.702
  %v454 = vmul.f32 %v323, 1.702
  %v455 = vmul.f32 %v327, 1.702
  %v456 = vmul.f32 %v329, 1.702
  %v457 = vmul.f32 %v331, 1.702
  %v458 = vmul.f32 %v333, 1.702
  %v459 = vmul.f32 %v337, 1.702
  %v460 = vmul.f32 %v339, 1.702
  %v461 = vmul.f32 %v341, 1.702
  %v462 = vmul.f32 %v343, 1.702
  %v463 = vmul.f32 %v347, 1.702
  %v464 = vmul.f32 %v349, 1.702
  %v465 = vmul.f32 %v351, 1.702
  %v466 = vmul.f32 %v353, 1.702
  %v467 = vmul.f32 %v357, 1.702
  %v468 = vmul.f32 %v359, 1.702
  %v469 = vmul.f32 %v361, 1.702
  %v470 = vmul.f32 %v363, 1.702
  %v471 = vmul.f32 %v367, 1.702
  %v472 = vmul.f32 %v369, 1.702
  %v473 = vmul.f32 %v371, 1.702
  %v474 = vmul.f32 %v373, 1.702
  %v475 = vmul.f32 %v377, 1.702
  %v476 = vmul.f32 %v379, 1.702
  %v477 = vmul.f32 %v381, 1.702
  %v478 = vmul.f32 %v383, 1.702
  %v479 = vmul.f32 %v387, 1.702
  %v480 = vmul.f32 %v389, 1.702
  %v481 = vmul.f32 %v391, 1.702
  %v482 = vmul.f32 %v393, 1.702
  %v483 = vmul.f32 %v397, 1.702
  %v484 = vmul.f32 %v399, 1.702
  %v485 = vmul.f32 %v401, 1.702
  %v486 = vmul.f32 %v403, 1.702
  %v487 = vmul.f32 %v407, 1.702
  %v488 = vmul.f32 %v409, 1.702
  %v489 = vmul.f32 %v411, 1.702
  %v490 = vmul.f32 %v413, 1.702
  %v491 = vmul.f32 %v417, 1.702
  %v492 = vmul.f32 %v419, 1.702
  %v493 = vmul.f32 %v421, 1.702
  %v494 = vmul.f32 %v423, 1.702
  %v495 = vmul.f32 %v427, 1.702
  %v496 = vmul.f32 %v429, 1.702
  %v497 = vmul.f32 %v431, 1.702
  %v498 = vmul.f32 %v433, 1.702
  %v499 = vxor.u32 %v435, 2147483648
  %v500 = vxor.u32 %v436, 2147483648
  %v501 = vxor.u32 %v437, 2147483648
  %v502 = vxor.u32 %v438, 2147483648
  %v503 = vxor.u32 %v439, 2147483648
  %v504 = vxor.u32 %v440, 2147483648
  %v505 = vxor.u32 %v441, 2147483648
  %v506 = vxor.u32 %v442, 2147483648
  %v507 = vxor.u32 %v443, 2147483648
  %v508 = vxor.u32 %v444, 2147483648
  %v509 = vxor.u32 %v445, 2147483648
  %v510 = vxor.u32 %v446, 2147483648
  %v511 = vxor.u32 %v447, 2147483648
  %v512 = vxor.u32 %v448, 2147483648
  %v513 = vxor.u32 %v449, 2147483648
  %v514 = vxor.u32 %v450, 2147483648
  %v515 = vxor.u32 %v451, 2147483648
  %v516 = vxor.u32 %v452, 2147483648
  %v517 = vxor.u32 %v453, 2147483648
  %v518 = vxor.u32 %v454, 2147483648
  %v519 = vxor.u32 %v455, 2147483648
  %v520 = vxor.u32 %v456, 2147483648
  %v521 = vxor.u32 %v457, 2147483648
  %v522 = vxor.u32 %v458, 2147483648
  %v523 = vxor.u32 %v459, 2147483648
  %v524 = vxor.u32 %v460, 2147483648
  %v525 = vxor.u32 %v461, 2147483648
  %v526 = vxor.u32 %v462, 2147483648
  %v527 = vxor.u32 %v463, 2147483648
  %v528 = vxor.u32 %v464, 2147483648
  %v529 = vxor.u32 %v465, 2147483648
  %v530 = vxor.u32 %v466, 2147483648
  %v531 = vxor.u32 %v467, 2147483648
  %v532 = vxor.u32 %v468, 2147483648
  %v533 = vxor.u32 %v469, 2147483648
  %v534 = vxor.u32 %v470, 2147483648
  %v535 = vxor.u32 %v471, 2147483648
  %v536 = vxor.u32 %v472, 2147483648
  %v537 = vxor.u32 %v473, 2147483648
  %v538 = vxor.u32 %v474, 2147483648
  %v539 = vxor.u32 %v475, 2147483648
  %v540 = vxor.u32 %v476, 2147483648
  %v541 = vxor.u32 %v477, 2147483648
  %v542 = vxor.u32 %v478, 2147483648
  %v543 = vxor.u32 %v479, 2147483648
  %v544 = vxor.u32 %v480, 2147483648
  %v545 = vxor.u32 %v481, 2147483648
  %v546 = vxor.u32 %v482, 2147483648
  %v547 = vxor.u32 %v483, 2147483648
  %v548 = vxor.u32 %v484, 2147483648
  %v549 = vxor.u32 %v485, 2147483648
  %v550 = vxor.u32 %v486, 2147483648
  %v551 = vxor.u32 %v487, 2147483648
  %v552 = vxor.u32 %v488, 2147483648
  %v553 = vxor.u32 %v489, 2147483648
  %v554 = vxor.u32 %v490, 2147483648
  %v555 = vxor.u32 %v491, 2147483648
  %v556 = vxor.u32 %v492, 2147483648
  %v557 = vxor.u32 %v493, 2147483648
  %v558 = vxor.u32 %v494, 2147483648
  %v559 = vxor.u32 %v495, 2147483648
  %v560 = vxor.u32 %v496, 2147483648
  %v561 = vxor.u32 %v497, 2147483648
  %v562 = vxor.u32 %v498, 2147483648
  %v563 = vmul.f32 %v499, 1.442695
  %v564 = vpow.pop %v563
  %v565 = vmul.f32 %v500, 1.442695
  %v566 = vpow.pop %v565
  %v567 = vmul.f32 %v501, 1.442695
  %v568 = vpow.pop %v567
  %v569 = vmul.f32 %v502, 1.442695
  %v570 = vpow.pop %v569
  %v571 = vmul.f32 %v503, 1.442695
  %v572 = vpow.pop %v571
  %v573 = vmul.f32 %v504, 1.442695
  %v574 = vpow.pop %v573
  %v575 = vmul.f32 %v505, 1.442695
  %v576 = vpow.pop %v575
  %v577 = vmul.f32 %v506, 1.442695
  %v578 = vpow.pop %v577
  %v579 = vmul.f32 %v507, 1.442695
  %v580 = vpow.pop %v579
  %v581 = vmul.f32 %v508, 1.442695
  %v582 = vpow.pop %v581
  %v583 = vmul.f32 %v509, 1.442695
  %v584 = vpow.pop %v583
  %v585 = vmul.f32 %v510, 1.442695
  %v586 = vpow.pop %v585
  %v587 = vmul.f32 %v511, 1.442695
  %v588 = vpow.pop %v587
  %v589 = vmul.f32 %v512, 1.442695
  %v590 = vpow.pop %v589
  %v591 = vmul.f32 %v513, 1.442695
  %v592 = vpow.pop %v591
  %v593 = vmul.f32 %v514, 1.442695
  %v594 = vpow.pop %v593
  %v595 = vmul.f32 %v515, 1.442695
  %v596 = vpow.pop %v595
  %v597 = vmul.f32 %v516, 1.442695
  %v598 = vpow.pop %v597
  %v599 = vmul.f32 %v517, 1.442695
  %v600 = vpow.pop %v599
  %v601 = vmul.f32 %v518, 1.442695
  %v602 = vpow.pop %v601
  %v603 = vmul.f32 %v519, 1.442695
  %v604 = vpow.pop %v603
  %v605 = vmul.f32 %v520, 1.442695
  %v606 = vpow.pop %v605
  %v607 = vmul.f32 %v521, 1.442695
  %v608 = vpow.pop %v607
  %v609 = vmul.f32 %v522, 1.442695
  %v610 = vpow.pop %v609
  %v611 = vmul.f32 %v523, 1.442695
  %v612 = vpow.pop %v611
  %v613 = vmul.f32 %v524, 1.442695
  %v614 = vpow.pop %v613
  %v615 = vmul.f32 %v525, 1.442695
  %v616 = vpow.pop %v615
  %v617 = vmul.f32 %v526, 1.442695
  %v618 = vpow.pop %v617
  %v619 = vmul.f32 %v527, 1.442695
  %v620 = vpow.pop %v619
  %v621 = vmul.f32 %v528, 1.442695
  %v622 = vpow.pop %v621
  %v623 = vmul.f32 %v529, 1.442695
  %v624 = vpow.pop %v623
  %v625 = vmul.f32 %v530, 1.442695
  %v626 = vpow.pop %v625
  %v627 = vmul.f32 %v531, 1.442695
  %v628 = vpow.pop %v627
  %v629 = vmul.f32 %v532, 1.442695
  %v630 = vpow.pop %v629
  %v631 = vmul.f32 %v533, 1.442695
  %v632 = vpow.pop %v631
  %v633 = vmul.f32 %v534, 1.442695
  %v634 = vpow.pop %v633
  %v635 = vmul.f32 %v535, 1.442695
  %v636 = vpow.pop %v635
  %v637 = vmul.f32 %v536, 1.442695
  %v638 = vpow.pop %v637
  %v639 = vmul.f32 %v537, 1.442695
  %v640 = vpow.pop %v639
  %v641 = vmul.f32 %v538, 1.442695
  %v642 = vpow.pop %v641
  %v643 = vmul.f32 %v539, 1.442695
  %v644 = vpow.pop %v643
  %v645 = vmul.f32 %v540, 1.442695
  %v646 = vpow.pop %v645
  %v647 = vmul.f32 %v541, 1.442695
  %v648 = vpow.pop %v647
  %v649 = vmul.f32 %v542, 1.442695
  %v650 = vpow.pop %v649
  %v651 = vmul.f32 %v543, 1.442695
  %v652 = vpow.pop %v651
  %v653 = vmul.f32 %v544, 1.442695
  %v654 = vpow.pop %v653
  %v655 = vmul.f32 %v545, 1.442695
  %v656 = vpow.pop %v655
  %v657 = vmul.f32 %v546, 1.442695
  %v658 = vpow.pop %v657
  %v659 = vmul.f32 %v547, 1.442695
  %v660 = vpow.pop %v659
  %v661 = vmul.f32 %v548, 1.442695
  %v662 = vpow.pop %v661
  %v663 = vmul.f32 %v549, 1.442695
  %v664 = vpow.pop %v663
  %v665 = vmul.f32 %v550, 1.442695
  %v666 = vpow.pop %v665
  %v667 = vmul.f32 %v551, 1.442695
  %v668 = vpow.pop %v667
  %v669 = vmul.f32 %v552, 1.442695
  %v670 = vpow.pop %v669
  %v671 = vmul.f32 %v553, 1.442695
  %v672 = vpow.pop %v671
  %v673 = vmul.f32 %v554, 1.442695
  %v674 = vpow.pop %v673
  %v675 = vmul.f32 %v555, 1.442695
  %v676 = vpow.pop %v675
  %v677 = vmul.f32 %v556, 1.442695
  %v678 = vpow.pop %v677
  %v679 = vmul.f32 %v557, 1.442695
  %v680 = vpow.pop %v679
  %v681 = vmul.f32 %v558, 1.442695
  %v682 = vpow.pop %v681
  %v683 = vmul.f32 %v559, 1.442695
  %v684 = vpow.pop %v683
  %v685 = vmul.f32 %v560, 1.442695
  %v686 = vpow.pop %v685
  %v687 = vmul.f32 %v561, 1.442695
  %v688 = vpow.pop %v687
  %v689 = vmul.f32 %v562, 1.442695
  %v690 = vpow.pop %v689
  %v691 = vadd.f32 %v564, 1.0
  %v692 = vadd.f32 %v566, 1.0
  %v693 = vadd.f32 %v568, 1.0
  %v694 = vadd.f32 %v570, 1.0
  %v695 = vadd.f32 %v572, 1.0
  %v696 = vadd.f32 %v574, 1.0
  %v697 = vadd.f32 %v576, 1.0
  %v698 = vadd.f32 %v578, 1.0
  %v699 = vadd.f32 %v580, 1.0
  %v700 = vadd.f32 %v582, 1.0
  %v701 = vadd.f32 %v584, 1.0
  %v702 = vadd.f32 %v586, 1.0
  %v703 = vadd.f32 %v588, 1.0
  %v704 = vadd.f32 %v590, 1.0
  %v705 = vadd.f32 %v592, 1.0
  %v706 = vadd.f32 %v594, 1.0
  %v707 = vadd.f32 %v596, 1.0
  %v708 = vadd.f32 %v598, 1.0
  %v709 = vadd.f32 %v600, 1.0
  %v710 = vadd.f32 %v602, 1.0
  %v711 = vadd.f32 %v604, 1.0
  %v712 = vadd.f32 %v606, 1.0
  %v713 = vadd.f32 %v608, 1.0
  %v714 = vadd.f32 %v610, 1.0
  %v715 = vadd.f32 %v612, 1.0
  %v716 = vadd.f32 %v614, 1.0
  %v717 = vadd.f32 %v616, 1.0
  %v718 = vadd.f32 %v618, 1.0
  %v719 = vadd.f32 %v620, 1.0
  %v720 = vadd.f32 %v622, 1.0
  %v721 = vadd.f32 %v624, 1.0
  %v722 = vadd.f32 %v626, 1.0
  %v723 = vadd.f32 %v628, 1.0
  %v724 = vadd.f32 %v630, 1.0
  %v725 = vadd.f32 %v632, 1.0
  %v726 = vadd.f32 %v634, 1.0
  %v727 = vadd.f32 %v636, 1.0
  %v728 = vadd.f32 %v638, 1.0
  %v729 = vadd.f32 %v640, 1.0
  %v730 = vadd.f32 %v642, 1.0
  %v731 = vadd.f32 %v644, 1.0
  %v732 = vadd.f32 %v646, 1.0
  %v733 = vadd.f32 %v648, 1.0
  %v734 = vadd.f32 %v650, 1.0
  %v735 = vadd.f32 %v652, 1.0
  %v736 = vadd.f32 %v654, 1.0
  %v737 = vadd.f32 %v656, 1.0
  %v738 = vadd.f32 %v658, 1.0
  %v739 = vadd.f32 %v660, 1.0
  %v740 = vadd.f32 %v662, 1.0
  %v741 = vadd.f32 %v664, 1.0
  %v742 = vadd.f32 %v666, 1.0
  %v743 = vadd.f32 %v668, 1.0
  %v744 = vadd.f32 %v670, 1.0
  %v745 = vadd.f32 %v672, 1.0
  %v746 = vadd.f32 %v674, 1.0
  %v747 = vadd.f32 %v676, 1.0
  %v748 = vadd.f32 %v678, 1.0
  %v749 = vadd.f32 %v680, 1.0
  %v750 = vadd.f32 %v682, 1.0
  %v751 = vadd.f32 %v684, 1.0
  %v752 = vadd.f32 %v686, 1.0
  %v753 = vadd.f32 %v688, 1.0
  %v754 = vadd.f32 %v690, 1.0
  %v755 = vrcp.pop %v691
  %v756 = vmul.f32 1.0, %v755
  %v757 = vrcp.pop %v692
  %v758 = vmul.f32 1.0, %v757
  %v759 = vrcp.pop %v693
  %v760 = vmul.f32 1.0, %v759
  %v761 = vrcp.pop %v694
  %v762 = vmul.f32 1.0, %v761
  %v763 = vrcp.pop %v695
  %v764 = vmul.f32 1.0, %v763
  %v765 = vrcp.pop %v696
  %v766 = vmul.f32 1.0, %v765
  %v767 = vrcp.pop %v697
  %v768 = vmul.f32 1.0, %v767
  %v769 = vrcp.pop %v698
  %v770 = vmul.f32 1.0, %v769
  %v771 = vrcp.pop %v699
  %v772 = vmul.f32 1.0, %v771
  %v773 = vrcp.pop %v700
  %v774 = vmul.f32 1.0, %v773
  %v775 = vrcp.pop %v701
  %v776 = vmul.f32 1.0, %v775
  %v777 = vrcp.pop %v702
  %v778 = vmul.f32 1.0, %v777
  %v779 = vrcp.pop %v703
  %v780 = vmul.f32 1.0, %v779
  %v781 = vrcp.pop %v704
  %v782 = vmul.f32 1.0, %v781
  %v783 = vrcp.pop %v705
  %v784 = vmul.f32 1.0, %v783
  %v785 = vrcp.pop %v706
  %v786 = vmul.f32 1.0, %v785
  %v787 = vrcp.pop %v707
  %v788 = vmul.f32 1.0, %v787
  %v789 = vrcp.pop %v708
  %v790 = vmul.f32 1.0, %v789
  %v791 = vrcp.pop %v709
  %v792 = vmul.f32 1.0, %v791
  %v793 = vrcp.pop %v710
  %v794 = vmul.f32 1.0, %v793
  %v795 = vrcp.pop %v711
  %v796 = vmul.f32 1.0, %v795
  %v797 = vrcp.pop %v712
  %v798 = vmul.f32 1.0, %v797
  %v799 = vrcp.pop %v713
  %v800 = vmul.f32 1.0, %v799
  %v801 = vrcp.pop %v714
  %v802 = vmul.f32 1.0, %v801
  %v803 = vrcp.pop %v715
  %v804 = vmul.f32 1.0, %v803
  %v805 = vrcp.pop %v716
  %v806 = vmul.f32 1.0, %v805
  %v807 = vrcp.pop %v717
  %v808 = vmul.f32 1.0, %v807
  %v809 = vrcp.pop %v718
  %v810 = vmul.f32 1.0, %v809
  %v811 = vrcp.pop %v719
  %v812 = vmul.f32 1.0, %v811
  %v813 = vrcp.pop %v720
  %v814 = vmul.f32 1.0, %v813
  %v815 = vrcp.pop %v721
  %v816 = vmul.f32 1.0, %v815
  %v817 = vrcp.pop %v722
  %v818 = vmul.f32 1.0, %v817
  %v819 = vrcp.pop %v723
  %v820 = vmul.f32 1.0, %v819
  %v821 = vrcp.pop %v724
  %v822 = vmul.f32 1.0, %v821
  %v823 = vrcp.pop %v725
  %v824 = vmul.f32 1.0, %v823
  %v825 = vrcp.pop %v726
  %v826 = vmul.f32 1.0, %v825
  %v827 = vrcp.pop %v727
  %v828 = vmul.f32 1.0, %v827
  %v829 = vrcp.pop %v728
  %v830 = vmul.f32 1.0, %v829
  %v831 = vrcp.pop %v729
  %v832 = vmul.f32 1.0, %v831
  %v833 = vrcp.pop %v730
  %v834 = vmul.f32 1.0, %v833
  %v835 = vrcp.pop %v731
  %v836 = vmul.f32 1.0, %v835
  %v837 = vrcp.pop %v732
  %v838 = vmul.f32 1.0, %v837
  %v839 = vrcp.pop %v733
  %v840 = vmul.f32 1.0, %v839
  %v841 = vrcp.pop %v734
  %v842 = vmul.f32 1.0, %v841
  %v843 = vrcp.pop %v735
  %v844 = vmul.f32 1.0, %v843
  %v845 = vrcp.pop %v736
  %v846 = vmul.f32 1.0, %v845
  %v847 = vrcp.pop %v737
  %v848 = vmul.f32 1.0, %v847
  %v849 = vrcp.pop %v738
  %v850 = vmul.f32 1.0, %v849
  %v851 = vrcp.pop %v739
  %v852 = vmul.f32 1.0, %v851
  %v853 = vrcp.pop %v740
  %v854 = vmul.f32 1.0, %v853
  %v855 = vrcp.pop %v741
  %v856 = vmul.f32 1.0, %v855
  %v857 = vrcp.pop %v742
  %v858 = vmul.f32 1.0, %v857
  %v859 = vrcp.pop %v743
  %v860 = vmul.f32 1.0, %v859
  %v861 = vrcp.pop %v744
  %v862 = vmul.f32 1.0, %v861
  %v863 = vrcp.pop %v745
  %v864 = vmul.f32 1.0, %v863
  %v865 = vrcp.pop %v746
  %v866 = vmul.f32 1.0, %v865
  %v867 = vrcp.pop %v747
  %v868 = vmul.f32 1.0, %v867
  %v869 = vrcp.pop %v748
  %v870 = vmul.f32 1.0, %v869
  %v871 = vrcp.pop %v749
  %v872 = vmul.f32 1.0, %v871
  %v873 = vrcp.pop %v750
  %v874 = vmul.f32 1.0, %v873
  %v875 = vrcp.pop %v751
  %v876 = vmul.f32 1.0, %v875
  %v877 = vrcp.pop %v752
  %v878 = vmul.f32 1.0, %v877
  %v879 = vrcp.pop %v753
  %v880 = vmul.f32 1.0, %v879
  %v881 = vrcp.pop %v754
  %v882 = vmul.f32 1.0, %v881
  %v883 = vmul.f32 %v277, %v756
  %v884 = vmul.f32 %v279, %v758
  %v885 = vmul.f32 %v281, %v760
  %v886 = vmul.f32 %v283, %v762
  %v887 = vmul.f32 %v287, %v764
  %v888 = vmul.f32 %v289, %v766
  %v889 = vmul.f32 %v291, %v768
  %v890 = vmul.f32 %v293, %v770
  %v891 = vmul.f32 %v297, %v772
  %v892 = vmul.f32 %v299, %v774
  %v893 = vmul.f32 %v301, %v776
  %v894 = vmul.f32 %v303, %v778
  %v895 = vmul.f32 %v307, %v780
  %v896 = vmul.f32 %v309, %v782
  %v897 = vmul.f32 %v311, %v784
  %v898 = vmul.f32 %v313, %v786
  %v899 = vmul.f32 %v317, %v788
  %v900 = vmul.f32 %v319, %v790
  %v901 = vmul.f32 %v321, %v792
  %v902 = vmul.f32 %v323, %v794
  %v903 = vmul.f32 %v327, %v796
  %v904 = vmul.f32 %v329, %v798
  %v905 = vmul.f32 %v331, %v800
  %v906 = vmul.f32 %v333, %v802
  %v907 = vmul.f32 %v337, %v804
  %v908 = vmul.f32 %v339, %v806
  %v909 = vmul.f32 %v341, %v808
  %v910 = vmul.f32 %v343, %v810
  %v911 = vmul.f32 %v347, %v812
  %v912 = vmul.f32 %v349, %v814
  %v913 = vmul.f32 %v351, %v816
  %v914 = vmul.f32 %v353, %v818
  %v915 = vmul.f32 %v357, %v820
  %v916 = vmul.f32 %v359, %v822
  %v917 = vmul.f32 %v361, %v824
  %v918 = vmul.f32 %v363, %v826
  %v919 = vmul.f32 %v367, %v828
  %v920 = vmul.f32 %v369, %v830
  %v921 = vmul.f32 %v371, %v832
  %v922 = vmul.f32 %v373, %v834
  %v923 = vmul.f32 %v377, %v836
  %v924 = vmul.f32 %v379, %v838
  %v925 = vmul.f32 %v381, %v840
  %v926 = vmul.f32 %v383, %v842
  %v927 = vmul.f32 %v387, %v844
  %v928 = vmul.f32 %v389, %v846
  %v929 = vmul.f32 %v391, %v848
  %v930 = vmul.f32 %v393, %v850
  %v931 = vmul.f32 %v397, %v852
  %v932 = vmul.f32 %v399, %v854
  %v933 = vmul.f32 %v401, %v856
  %v934 = vmul.f32 %v403, %v858
  %v935 = vmul.f32 %v407, %v860
  %v936 = vmul.f32 %v409, %v862
  %v937 = vmul.f32 %v411, %v864
  %v938 = vmul.f32 %v413, %v866
  %v939 = vmul.f32 %v417, %v868
  %v940 = vmul.f32 %v419, %v870
  %v941 = vmul.f32 %v421, %v872
  %v942 = vmul.f32 %v423, %v874
  %v943 = vmul.f32 %v427, %v876
  %v944 = vmul.f32 %v429, %v878
  %v945 = vmul.f32 %v431, %v880
  %v946 = vmul.f32 %v433, %v882
  %v947 = vpack.c.bf16 %v885, %v883
  %v948 = vpack.c.bf16 %v886, %v884
  %v949 = vpack.c.bf16 %v889, %v887
  %v950 = vpack.c.bf16 %v890, %v888
  %v951 = vpack.c.bf16 %v893, %v891
  %v952 = vpack.c.bf16 %v894, %v892
  %v953 = vpack.c.bf16 %v897, %v895
  %v954 = vpack.c.bf16 %v898, %v896
  %v955 = vpack.c.bf16 %v901, %v899
  %v956 = vpack.c.bf16 %v902, %v900
  %v957 = vpack.c.bf16 %v905, %v903
  %v958 = vpack.c.bf16 %v906, %v904
  %v959 = vpack.c.bf16 %v909, %v907
  %v960 = vpack.c.bf16 %v910, %v908
  %v961 = vpack.c.bf16 %v913, %v911
  %v962 = vpack.c.bf16 %v914, %v912
  %v963 = vpack.c.bf16 %v917, %v915
  %v964 = vpack.c.bf16 %v918, %v916
  %v965 = vpack.c.bf16 %v921, %v919
  %v966 = vpack.c.bf16 %v922, %v920
  %v967 = vpack.c.bf16 %v925, %v923
  %v968 = vpack.c.bf16 %v926, %v924
  %v969 = vpack.c.bf16 %v929, %v927
  %v970 = vpack.c.bf16 %v930, %v928
  %v971 = vpack.c.bf16 %v933, %v931
  %v972 = vpack.c.bf16 %v934, %v932
  %v973 = vpack.c.bf16 %v937, %v935
  %v974 = vpack.c.bf16 %v938, %v936
  %v975 = vpack.c.bf16 %v941, %v939
  %v976 = vpack.c.bf16 %v942, %v940
  %v977 = vpack.c.bf16 %v945, %v943
  %v978 = vpack.c.bf16 %v946, %v944
  %v979 = vld [vmem:[%s3] sm:$0xf]
  %v980 = vld [vmem:[%s3 + $0x4] sm:$0xf]
  %v981 = vld [vmem:[%s3 + $0x8] sm:$0xf]
  %v982 = vld [vmem:[%s3 + $0xc] sm:$0xf]
  %v983 = vld [vmem:[%s3 + $0x10] sm:$0xf]
  %v984 = vld [vmem:[%s3 + $0x14] sm:$0xf]
  %v985 = vld [vmem:[%s3 + $0x18] sm:$0xf]
  %v986 = vld [vmem:[%s3 + $0x1c] sm:$0xf]
  %v987 = vld [vmem:[%s3 + $0x20] sm:$0xf]
  %v988 = vld [vmem:[%s3 + $0x24] sm:$0xf]
  %v989 = vld [vmem:[%s3 + $0x28] sm:$0xf]
  %v990 = vld [vmem:[%s3 + $0x2c] sm:$0xf]
  %v991 = vld [vmem:[%s3 + $0x30] sm:$0xf]
  %v992 = vld [vmem:[%s3 + $0x34] sm:$0xf]
  %v993 = vld [vmem:[%s3 + $0x38] sm:$0xf]
  %v994 = vld [vmem:[%s3 + $0x3c] sm:$0xf]
  %v995 = vld [vmem:[%s3 + $0x40] sm:$0xf]
  %v996 = vld [vmem:[%s3 + $0x44] sm:$0xf]
  %v997 = vld [vmem:[%s3 + $0x48] sm:$0xf]
  %v998 = vld [vmem:[%s3 + $0x4c] sm:$0xf]
  %v999 = vld [vmem:[%s3 + $0x50] sm:$0xf]
  %v1000 = vld [vmem:[%s3 + $0x54] sm:$0xf]
  %v1001 = vld [vmem:[%s3 + $0x58] sm:$0xf]
  %v1002 = vld [vmem:[%s3 + $0x5c] sm:$0xf]
  %v1003 = vld [vmem:[%s3 + $0x60] sm:$0xf]
  %v1004 = vld [vmem:[%s3 + $0x64] sm:$0xf]
  %v1005 = vld [vmem:[%s3 + $0x68] sm:$0xf]
  %v1006 = vld [vmem:[%s3 + $0x6c] sm:$0xf]
  %v1007 = vld [vmem:[%s3 + $0x70] sm:$0xf]
  %v1008 = vld [vmem:[%s3 + $0x74] sm:$0xf]
  %v1009 = vld [vmem:[%s3 + $0x78] sm:$0xf]
  %v1010 = vld [vmem:[%s3 + $0x7c] sm:$0xf]
  %v1011 = vld [vmem:[%s4] sm:$0x1]
  %v1013 = vlaneseq
  %v1014 = vshrl.u32 %v1013, 7
  %v1015 = vsub.s32 0, %v1014
  %v1016 = vrot.slane %v1011, %v1015
  %v1050 = vunpack.c.l.b16 %v979
  %v1051 = vunpack.c.l.b16 %v980
  %v1052 = vunpack.c.l.b16 %v981
  %v1053 = vunpack.c.l.b16 %v982
  %v1054 = vunpack.c.l.b16 %v983
  %v1055 = vunpack.c.l.b16 %v984
  %v1056 = vunpack.c.l.b16 %v985
  %v1057 = vunpack.c.l.b16 %v986
  %v1058 = vunpack.c.l.b16 %v987
  %v1059 = vunpack.c.l.b16 %v988
  %v1060 = vunpack.c.l.b16 %v989
  %v1061 = vunpack.c.l.b16 %v990
  %v1062 = vunpack.c.l.b16 %v991
  %v1063 = vunpack.c.l.b16 %v992
  %v1064 = vunpack.c.l.b16 %v993
  %v1065 = vunpack.c.l.b16 %v994
  %v1066 = vunpack.c.l.b16 %v995
  %v1067 = vunpack.c.l.b16 %v996
  %v1068 = vunpack.c.l.b16 %v997
  %v1069 = vunpack.c.l.b16 %v998
  %v1070 = vunpack.c.l.b16 %v999
  %v1071 = vunpack.c.l.b16 %v1000
  %v1072 = vunpack.c.l.b16 %v1001
  %v1073 = vunpack.c.l.b16 %v1002
  %v1074 = vunpack.c.l.b16 %v1003
  %v1075 = vunpack.c.l.b16 %v1004
  %v1076 = vunpack.c.l.b16 %v1005
  %v1077 = vunpack.c.l.b16 %v1006
  %v1078 = vunpack.c.l.b16 %v1007
  %v1079 = vunpack.c.l.b16 %v1008
  %v1080 = vunpack.c.l.b16 %v1009
  %v1081 = vunpack.c.l.b16 %v1010
  %v1082 = vpack.c.b16 %v1051, %v1050
  %v1083 = vpack.c.b16 %v1053, %v1052
  %v1084 = vpack.c.b16 %v1055, %v1054
  %v1085 = vpack.c.b16 %v1057, %v1056
  %v1086 = vpack.c.b16 %v1059, %v1058
  %v1087 = vpack.c.b16 %v1061, %v1060
  %v1088 = vpack.c.b16 %v1063, %v1062
  %v1089 = vpack.c.b16 %v1065, %v1064
  %v1090 = vpack.c.b16 %v1067, %v1066
  %v1091 = vpack.c.b16 %v1069, %v1068
  %v1092 = vpack.c.b16 %v1071, %v1070
  %v1093 = vpack.c.b16 %v1073, %v1072
  %v1094 = vpack.c.b16 %v1075, %v1074
  %v1095 = vpack.c.b16 %v1077, %v1076
  %v1096 = vpack.c.b16 %v1079, %v1078
  %v1097 = vpack.c.b16 %v1081, %v1080
  %1114 = vmatprep.subr.bf16.mxu0 0
  %1115 = vmatpush1.bf16.msra.mxu0 %v1089
  %1116 = vmatprep.subr.bf16.mxu0 0
  %1117 = vmatpush1.bf16.msra.mxu0 %v1088
  %1118 = vmatprep.subr.bf16.mxu0 0
  %1119 = vmatpush1.bf16.msra.mxu0 %v1087
  %1120 = vmatprep.subr.bf16.mxu0 0
  %1121 = vmatpush1.bf16.msra.mxu0 %v1086
  %1122 = vmatprep.subr.bf16.mxu0 0
  %1123 = vmatpush1.bf16.msra.mxu0 %v1085
  %1124 = vmatprep.subr.bf16.mxu0 0
  %1125 = vmatpush1.bf16.msra.mxu0 %v1084
  %1126 = vmatprep.subr.bf16.mxu0 0
  %1127 = vmatpush1.bf16.msra.mxu0 %v1083
  %1128 = vmatprep.subr.bf16.mxu0 0
  %1129 = vmatpush1.bf16.msra.mxu0 %v1082
  %1130 = vmatprep.subr.bf16.mxu0 0
  %1131 = vmatpush2.bf16.msra.mxu0 %v1097
  %1132 = vmatprep.subr.bf16.mxu0 0
  %1133 = vmatpush2.bf16.msra.mxu0 %v1096
  %1134 = vmatprep.subr.bf16.mxu0 0
  %1135 = vmatpush2.bf16.msra.mxu0 %v1095
  %1136 = vmatprep.subr.bf16.mxu0 0
  %1137 = vmatpush2.bf16.msra.mxu0 %v1094
  %1138 = vmatprep.subr.bf16.mxu0 0
  %1139 = vmatpush2.bf16.msra.mxu0 %v1093
  %1140 = vmatprep.subr.bf16.mxu0 0
  %1141 = vmatpush2.bf16.msra.mxu0 %v1092
  %1142 = vmatprep.subr.bf16.mxu0 0
  %1143 = vmatpush2.bf16.msra.mxu0 %v1091
  %1144 = vmatprep.subr.bf16.mxu0 0
  %1145 = vmatpush2.bf16.msra.mxu0 %v1090
  %1146 = vmatprep.mubr.bf16.mxu0 %v948
  %1147 = vmatmul.mubr.bf16.gmra.mxu0 %v947
  %v1148 = vpop.f32.mrf.mxu0
  %v1149 = vadd.f32 %v1016, %v1148
  %v1150 = vpop.f32.mrf.mxu0
  %v1151 = vpop.f32.mrf.mxu0
  %v1152 = vadd.f32 %v1016, %v1151
  %v1153 = vpop.f32.mrf.mxu0
  %1154 = vmatprep.mubr.bf16.mxu0 %v950
  %1155 = vmatmul.mubr.bf16.gmra.mxu0 %v949
  %v1156 = vpop.f32.mrf.mxu0
  %v1157 = vadd.f32 %v1016, %v1156
  %v1158 = vpop.f32.mrf.mxu0
  %v1159 = vpop.f32.mrf.mxu0
  %v1160 = vadd.f32 %v1016, %v1159
  %v1161 = vpop.f32.mrf.mxu0
  %1162 = vmatprep.mubr.bf16.mxu0 %v952
  %1163 = vmatmul.mubr.bf16.gmra.mxu0 %v951
  %v1164 = vpop.f32.mrf.mxu0
  %v1165 = vadd.f32 %v1016, %v1164
  %v1166 = vpop.f32.mrf.mxu0
  %v1167 = vpop.f32.mrf.mxu0
  %v1168 = vadd.f32 %v1016, %v1167
  %v1169 = vpop.f32.mrf.mxu0
  %1170 = vmatprep.mubr.bf16.mxu0 %v954
  %1171 = vmatmul.mubr.bf16.gmra.mxu0 %v953
  %v1172 = vpop.f32.mrf.mxu0
  %v1173 = vadd.f32 %v1016, %v1172
  %v1174 = vpop.f32.mrf.mxu0
  %v1175 = vpop.f32.mrf.mxu0
  %v1176 = vadd.f32 %v1016, %v1175
  %v1177 = vpop.f32.mrf.mxu0
  %1178 = vmatprep.mubr.bf16.mxu0 %v956
  %1179 = vmatmul.mubr.bf16.gmra.mxu0 %v955
  %v1180 = vpop.f32.mrf.mxu0
  %v1181 = vadd.f32 %v1016, %v1180
  %v1182 = vpop.f32.mrf.mxu0
  %v1183 = vpop.f32.mrf.mxu0
  %v1184 = vadd.f32 %v1016, %v1183
  %v1185 = vpop.f32.mrf.mxu0
  %1186 = vmatprep.mubr.bf16.mxu0 %v958
  %1187 = vmatmul.mubr.bf16.gmra.mxu0 %v957
  %v1188 = vpop.f32.mrf.mxu0
  %v1189 = vadd.f32 %v1016, %v1188
  %v1190 = vpop.f32.mrf.mxu0
  %v1191 = vpop.f32.mrf.mxu0
  %v1192 = vadd.f32 %v1016, %v1191
  %v1193 = vpop.f32.mrf.mxu0
  %1194 = vmatprep.mubr.bf16.mxu0 %v960
  %1195 = vmatmul.mubr.bf16.gmra.mxu0 %v959
  %v1196 = vpop.f32.mrf.mxu0
  %v1197 = vadd.f32 %v1016, %v1196
  %v1198 = vpop.f32.mrf.mxu0
  %v1199 = vpop.f32.mrf.mxu0
  %v1200 = vadd.f32 %v1016, %v1199
  %v1201 = vpop.f32.mrf.mxu0
  %1202 = vmatprep.mubr.bf16.mxu0 %v962
  %1203 = vmatmul.mubr.bf16.gmra.mxu0 %v961
  %v1204 = vpop.f32.mrf.mxu0
  %v1205 = vadd.f32 %v1016, %v1204
  %v1206 = vpop.f32.mrf.mxu0
  %v1207 = vpop.f32.mrf.mxu0
  %v1208 = vadd.f32 %v1016, %v1207
  %v1209 = vpop.f32.mrf.mxu0
  %1210 = vmatprep.mubr.bf16.mxu0 %v964
  %1211 = vmatmul.mubr.bf16.gmra.mxu0 %v963
  %v1212 = vpop.f32.mrf.mxu0
  %v1213 = vadd.f32 %v1016, %v1212
  %v1214 = vpop.f32.mrf.mxu0
  %v1215 = vpop.f32.mrf.mxu0
  %v1216 = vadd.f32 %v1016, %v1215
  %v1217 = vpop.f32.mrf.mxu0
  %1218 = vmatprep.mubr.bf16.mxu0 %v966
  %1219 = vmatmul.mubr.bf16.gmra.mxu0 %v965
  %v1220 = vpop.f32.mrf.mxu0
  %v1221 = vadd.f32 %v1016, %v1220
  %v1222 = vpop.f32.mrf.mxu0
  %v1223 = vpop.f32.mrf.mxu0
  %v1224 = vadd.f32 %v1016, %v1223
  %v1225 = vpop.f32.mrf.mxu0
  %1226 = vmatprep.mubr.bf16.mxu0 %v968
  %1227 = vmatmul.mubr.bf16.gmra.mxu0 %v967
  %v1228 = vpop.f32.mrf.mxu0
  %v1229 = vadd.f32 %v1016, %v1228
  %v1230 = vpop.f32.mrf.mxu0
  %v1231 = vpop.f32.mrf.mxu0
  %v1232 = vadd.f32 %v1016, %v1231
  %v1233 = vpop.f32.mrf.mxu0
  %1234 = vmatprep.mubr.bf16.mxu0 %v970
  %1235 = vmatmul.mubr.bf16.gmra.mxu0 %v969
  %v1236 = vpop.f32.mrf.mxu0
  %v1237 = vadd.f32 %v1016, %v1236
  %v1238 = vpop.f32.mrf.mxu0
  %v1239 = vpop.f32.mrf.mxu0
  %v1240 = vadd.f32 %v1016, %v1239
  %v1241 = vpop.f32.mrf.mxu0
  %1242 = vmatprep.mubr.bf16.mxu0 %v972
  %1243 = vmatmul.mubr.bf16.gmra.mxu0 %v971
  %v1244 = vpop.f32.mrf.mxu0
  %v1245 = vadd.f32 %v1016, %v1244
  %v1246 = vpop.f32.mrf.mxu0
  %v1247 = vpop.f32.mrf.mxu0
  %v1248 = vadd.f32 %v1016, %v1247
  %v1249 = vpop.f32.mrf.mxu0
  %1250 = vmatprep.mubr.bf16.mxu0 %v974
  %1251 = vmatmul.mubr.bf16.gmra.mxu0 %v973
  %v1252 = vpop.f32.mrf.mxu0
  %v1253 = vadd.f32 %v1016, %v1252
  %v1254 = vpop.f32.mrf.mxu0
  %v1255 = vpop.f32.mrf.mxu0
  %v1256 = vadd.f32 %v1016, %v1255
  %v1257 = vpop.f32.mrf.mxu0
  %1258 = vmatprep.mubr.bf16.mxu0 %v976
  %1259 = vmatmul.mubr.bf16.gmra.mxu0 %v975
  %v1260 = vpop.f32.mrf.mxu0
  %v1261 = vadd.f32 %v1016, %v1260
  %v1262 = vpop.f32.mrf.mxu0
  %v1263 = vpop.f32.mrf.mxu0
  %v1264 = vadd.f32 %v1016, %v1263
  %v1265 = vpop.f32.mrf.mxu0
  %1266 = vmatprep.mubr.bf16.mxu0 %v978
  %1267 = vmatmul.mubr.bf16.gmra.mxu0 %v977
  %v1268 = vpop.f32.mrf.mxu0
  %v1269 = vadd.f32 %v1016, %v1268
  %v1270 = vpop.f32.mrf.mxu0
  %v1271 = vpop.f32.mrf.mxu0
  %v1272 = vadd.f32 %v1016, %v1271
  %v1273 = vpop.f32.mrf.mxu0
  %1274 = vdwg.mxu0
  %1275 = vst.msk [vmem:[%s5] sm:$0xff] %vm193, %v1149
  %1276 = vst.msk [vmem:[%s5 + $0x8] sm:$0xff] %vm193, %v1152
  %1277 = vst.msk [vmem:[%s5 + $0x10] sm:$0xff] %vm193, %v1157
  %1278 = vst.msk [vmem:[%s5 + $0x18] sm:$0xff] %vm193, %v1160
  %1279 = vst.msk [vmem:[%s5 + $0x20] sm:$0xff] %vm193, %v1165
  %1280 = vst.msk [vmem:[%s5 + $0x28] sm:$0xff] %vm193, %v1168
  %1281 = vst.msk [vmem:[%s5 + $0x30] sm:$0xff] %vm193, %v1173
  %1282 = vst.msk [vmem:[%s5 + $0x38] sm:$0xff] %vm193, %v1176
  %1283 = vst.msk [vmem:[%s5 + $0x40] sm:$0xff] %vm193, %v1181
  %1284 = vst.msk [vmem:[%s5 + $0x48] sm:$0xff] %vm193, %v1184
  %1285 = vst.msk [vmem:[%s5 + $0x50] sm:$0xff] %vm193, %v1189
  %1286 = vst.msk [vmem:[%s5 + $0x58] sm:$0xff] %vm193, %v1192
  %1287 = vst.msk [vmem:[%s5 + $0x60] sm:$0xff] %vm193, %v1197
  %1288 = vst.msk [vmem:[%s5 + $0x68] sm:$0xff] %vm193, %v1200
  %1289 = vst.msk [vmem:[%s5 + $0x70] sm:$0xff] %vm193, %v1205
  %1290 = vst.msk [vmem:[%s5 + $0x78] sm:$0xff] %vm193, %v1208
  %1291 = vst.msk [vmem:[%s5 + $0x80] sm:$0xff] %vm193, %v1213
  %1292 = vst.msk [vmem:[%s5 + $0x88] sm:$0xff] %vm193, %v1216
  %1293 = vst.msk [vmem:[%s5 + $0x90] sm:$0xff] %vm193, %v1221
  %1294 = vst.msk [vmem:[%s5 + $0x98] sm:$0xff] %vm193, %v1224
  %1295 = vst.msk [vmem:[%s5 + $0xa0] sm:$0xff] %vm193, %v1229
  %1296 = vst.msk [vmem:[%s5 + $0xa8] sm:$0xff] %vm193, %v1232
  %1297 = vst.msk [vmem:[%s5 + $0xb0] sm:$0xff] %vm193, %v1237
  %1298 = vst.msk [vmem:[%s5 + $0xb8] sm:$0xff] %vm193, %v1240
  %1299 = vst.msk [vmem:[%s5 + $0xc0] sm:$0xff] %vm193, %v1245
  %1300 = vst.msk [vmem:[%s5 + $0xc8] sm:$0xff] %vm193, %v1248
  %1301 = vst.msk [vmem:[%s5 + $0xd0] sm:$0xff] %vm193, %v1253
  %1302 = vst.msk [vmem:[%s5 + $0xd8] sm:$0xff] %vm193, %v1256
  %1303 = vst.msk [vmem:[%s5 + $0xe0] sm:$0xff] %vm193, %v1261
  %1304 = vst.msk [vmem:[%s5 + $0xe8] sm:$0xff] %vm193, %v1264
  %1305 = vst.msk [vmem:[%s5 + $0xf0] sm:$0xff] %vm193, %v1269
  %1306 = vst.msk [vmem:[%s5 + $0xf8] sm:$0xff] %vm193, %v1272
  // Predicated region
  $region22: #{pallas_transformer_mlp.1} parent=0 // pred_check
    _
  $region23: #{pallas_transformer_mlp.1} parent=0 // pred_check_branch
    %1308 = sbr.rel (0) target = $region25
  $region24: #{pallas_transformer_mlp.1} parent=0 // pred_region
    _
  $region25: #{pallas_transformer_mlp.1} parent=0 // pred_fallthru
    _
  // Predicated region
  $region26: #{pallas_transformer_mlp.1} parent=0 // pred_check
    _
  $region27: #{pallas_transformer_mlp.1} parent=0 // pred_check_branch
    %1310 = sbr.rel (0) target = $region29
  $region28: #{pallas_transformer_mlp.1} parent=0 // pred_region
    _
  $region29: #{pallas_transformer_mlp.1} parent=0 // pred_fallthru
    _

</llo_original>
